<compile_context>
chip_gen: v5e
topology: v5e:2x2
jax: 0.10.0
libtpu: 0.0.40
codegen_flags: <defaults>
</compile_context>

<pallas_src>
import functools

import jax
import jax.numpy as jnp
import numpy as np
from jax.experimental import pallas as pl
from jax.experimental.pallas import tpu as pltpu


def gcn_encoder_kernel(
    h0_ref, a_hbm_ref,
    gamma_ref, beta_ref, wcat_ref,
    w1_ref, b1_ref, w2_ref, b2_ref,
    h_out_ref,
    a_vmem, xw_vmem, a_sem,
    *, eps,
):
    l = pl.program_id(0)
    n, h_dim = h0_ref.shape
    num_bonds = xw_vmem.shape[0] // n

    @pl.when(l == 0)
    def _():
        # Residual hidden state starts from the embedded node features.
        h_out_ref[...] = h0_ref[...]
        # One-time copy of the grid-invariant fused adjacency (bf16, exact 0/1)
        # into a persistent VMEM scratch — single-buffered by hand instead of
        # the default 2-deep pipeline buffers.
        cp = pltpu.make_async_copy(a_hbm_ref, a_vmem, a_sem.at[0])
        cp.start()
        cp.wait()

    h = h_out_ref[...]

    # ---- EncoderLayer ----
    # LayerNorm over the feature axis (f32 elementwise; rsqrt goes to the EUP).
    mean = jnp.mean(h, axis=-1, keepdims=True)
    var = jnp.mean((h - mean) ** 2, axis=-1, keepdims=True)
    ln = (h - mean) * jax.lax.rsqrt(var + eps)
    ln = ln * gamma_ref[0] + beta_ref[0]

    # GCLayer (fused): four GCNConv (add_self_loops=False, normalize=False,
    # bias=False) => sum_b A_b @ (x @ W_b).  An all-zero adjacency contributes
    # 0, matching the `if adj.nnz() > 0` guard exactly.
    #   1) lane-dense dot against the concatenated weight [H, 4H]
    xw_all = jnp.dot(ln, wcat_ref[0], preferred_element_type=jnp.float32)
    #   2) restack the four [N, H] halves to [4N, H] (sublane offsets, bf16)
    for b in range(num_bonds):
        xw_vmem[pl.ds(b * n, n), :] = (
            xw_all[:, b * h_dim:(b + 1) * h_dim].astype(xw_vmem.dtype))
    #   3) one deep-K matmul against A_cat ([N, 4N], bf16) -> f32 accumulate
    out_gcn = jnp.dot(a_vmem[...], xw_vmem[...],
                      preferred_element_type=jnp.float32)

    h = ln + out_gcn  # residual on the layer-normed states (as in the reference)

    # FeedForward: Linear -> (dropout=id) -> LeakyReLU(0.01) -> Linear
    inter = jnp.dot(h, w1_ref[0], preferred_element_type=jnp.float32) + b1_ref[0]
    inter = jnp.where(inter > 0, inter, 0.01 * inter)
    ff = jnp.dot(inter, w2_ref[0], preferred_element_type=jnp.float32) + b2_ref[0]

    h_out_ref[...] = h + ff


def gcn_model_forward(node_ids, adj_i, adj_ii, adj_iii, adj_a, batch, params,
                      *, eps=1e-6):
    # Glue: embedding gather (padding_idx=0 row is already zero in the table).
    h0 = params["embedding"][node_ids].astype(jnp.float32)        # [N, H]
    N, H = h0.shape
    L = params["gamma"].shape[0]
    I = params["w1"].shape[-1]

    # Fused operands: lane-concatenated adjacency (bf16 — values are exact 0/1,
    # so lossless) and lane-concatenated per-layer bond weights.
    a_cat = jnp.concatenate(
        [adj_i, adj_ii, adj_iii, adj_a], axis=1).astype(jnp.bfloat16)   # [N, 4N]
    w_cat = jnp.concatenate(
        [params["w_i"], params["w_ii"], params["w_iii"], params["w_a"]],
        axis=2)                                                         # [L, H, 4H]

    full2 = lambda l: (0, 0)
    per_layer3 = lambda l: (l, 0, 0)

    kernel = functools.partial(gcn_encoder_kernel, eps=eps)

    h_out = pl.pallas_call(
        kernel,
        grid=(L,),
        in_specs=[
            pl.BlockSpec((N, H), full2),              # h0
            pl.BlockSpec(memory_space=pl.ANY),        # A_cat (HBM; manual copy)
            pl.BlockSpec((1, 1, H), per_layer3),      # gamma
            pl.BlockSpec((1, 1, H), per_layer3),      # beta
            pl.BlockSpec((1, H, 4 * H), per_layer3),  # [W_i|W_ii|W_iii|W_a]
            pl.BlockSpec((1, H, I), per_layer3),      # ff w1
            pl.BlockSpec((1, 1, I), per_layer3),      # ff b1
            pl.BlockSpec((1, I, H), per_layer3),      # ff w2
            pl.BlockSpec((1, 1, H), per_layer3),      # ff b2
        ],
        out_specs=pl.BlockSpec((N, H), full2),
        out_shape=jax.ShapeDtypeStruct((N, H), jnp.float32),
        scratch_shapes=[
            pltpu.VMEM((N, 4 * N), jnp.bfloat16),     # resident A_cat
            pltpu.VMEM((4 * N, H), jnp.bfloat16),     # restacked xw
            pltpu.SemaphoreType.DMA((1,)),
        ],
        compiler_params=pltpu.CompilerParams(
            dimension_semantics=("arbitrary",),
            vmem_limit_bytes=48 * 1024 * 1024,        # fits under v7x's 64 MiB/TC
        ),
    )(
        h0, a_cat,
        params["gamma"].reshape(L, 1, H), params["beta"].reshape(L, 1, H),
        w_cat,
        params["w1"], params["b1"].reshape(L, 1, I),
        params["w2"], params["b2"].reshape(L, 1, H),
    )

    # Pooling + logistic-regression head in plain JAX (O(G*N*H), lane width 1).
    G = int(np.max(np.asarray(batch))) + 1
    one_hot = (jnp.asarray(batch)[None, :] == jnp.arange(G)[:, None]).astype(jnp.float32)
    counts = jnp.maximum(one_hot.sum(axis=1, keepdims=True), 1.0)
    vec = (one_hot @ h_out) / counts                               # [G, H]
    prop = vec @ params["head_w"] + params["head_b"]               # [G, 1]
    # Matches (prop, vec, hidden_states, all_hidden_states) minus the optional list.
    return prop, vec, h_out


def reference_forward(node_ids, adj_i, adj_ii, adj_iii, adj_a, batch, params,
                      *, eps=1e-6):
    h = params["embedding"][node_ids].astype(jnp.float32)
    L = params["gamma"].shape[0]
    for l in range(L):
        mean = jnp.mean(h, -1, keepdims=True)
        var = jnp.mean((h - mean) ** 2, -1, keepdims=True)
        ln = (h - mean) / jnp.sqrt(var + eps) * params["gamma"][l] + params["beta"][l]
        gcn = (adj_i @ (ln @ params["w_i"][l]) + adj_ii @ (ln @ params["w_ii"][l])
               + adj_iii @ (ln @ params["w_iii"][l]) + adj_a @ (ln @ params["w_a"][l]))
        h = ln + gcn
        inter = h @ params["w1"][l] + params["b1"][l]
        inter = jnp.where(inter > 0, inter, 0.01 * inter)
        h = h + inter @ params["w2"][l] + params["b2"][l]
    G = int(np.max(np.asarray(batch))) + 1
    one_hot = (jnp.asarray(batch)[None, :] == jnp.arange(G)[:, None]).astype(jnp.float32)
    vec = one_hot @ h / jnp.maximum(one_hot.sum(1, keepdims=True), 1.0)
    prop = vec @ params["head_w"] + params["head_b"]
    return prop, vec, h


def make_params(key, *, vocab, hidden, intermediate, num_layers):
    keys = jax.random.split(key, 12)
    s = 0.1
    emb = s * jax.random.normal(keys[0], (vocab, hidden), jnp.float32)
    emb = emb.at[0].set(0.0)  # padding_idx=0
    p = {
        "embedding": emb,
        "gamma": jnp.ones((num_layers, hidden), jnp.float32),
        "beta": jnp.zeros((num_layers, hidden), jnp.float32),
        "w_i": s * jax.random.normal(keys[1], (num_layers, hidden, hidden), jnp.float32),
        "w_ii": s * jax.random.normal(keys[2], (num_layers, hidden, hidden), jnp.float32),
        "w_iii": s * jax.random.normal(keys[3], (num_layers, hidden, hidden), jnp.float32),
        "w_a": s * jax.random.normal(keys[4], (num_layers, hidden, hidden), jnp.float32),
        "w1": s * jax.random.normal(keys[5], (num_layers, hidden, intermediate), jnp.float32),
        "b1": s * jax.random.normal(keys[6], (num_layers, intermediate), jnp.float32),
        "w2": s * jax.random.normal(keys[7], (num_layers, intermediate, hidden), jnp.float32),
        "b2": s * jax.random.normal(keys[8], (num_layers, hidden), jnp.float32),
        "head_w": s * jax.random.normal(keys[9], (hidden, 1), jnp.float32),
        "head_b": s * jax.random.normal(keys[10], (1,), jnp.float32),
    }
    return p


if __name__ == "__main__":
    NUM_LAYERS, HIDDEN, INTER = 2, 32, 64
    N_NODES, VOCAB = 16, 16

    key = jax.random.PRNGKey(0)
    kp, kn, ke = jax.random.split(key, 3)
    params = make_params(kp, vocab=VOCAB, hidden=HIDDEN,
                         intermediate=INTER, num_layers=NUM_LAYERS)

    # Synthetic graph batch: 2 molecules of 8 atoms each.
    node_ids = jax.random.randint(kn, (N_NODES,), 1, VOCAB)          # atom indices
    batch = jnp.array([0] * 8 + [1] * 8, jnp.int32)                  # graph assignment

    # Dense per-bond-type adjacencies (edges only within each molecule).
    def rand_adj(k):
        a = (jax.random.uniform(k, (N_NODES, N_NODES)) < 0.3).astype(jnp.float32)
        block = (batch[:, None] == batch[None, :]).astype(jnp.float32)
        return a * block * (1.0 - jnp.eye(N_NODES, dtype=jnp.float32))

    k1, k2, k3, k4 = jax.random.split(ke, 4)
    adj_i, adj_ii, adj_iii = rand_adj(k1), rand_adj(k2), rand_adj(k3)
    adj_a = jnp.zeros((N_NODES, N_NODES), jnp.float32)  # no aromatic bonds (nnz == 0 path)

    prop, vec, hidden = gcn_model_forward(
        node_ids, adj_i, adj_ii, adj_iii, adj_a, batch, params)
    jax.block_until_ready((prop, vec, hidden))

    prop_r, vec_r, hidden_r = reference_forward(
        node_ids, adj_i, adj_ii, adj_iii, adj_a, batch, params)
    # Tolerances relaxed vs. the pure-f32 variant because the A @ xw matmul now
    # runs with bf16 operands on the MXU (f32 accumulation).
    np.testing.assert_allclose(np.asarray(prop), np.asarray(prop_r), rtol=3e-2, atol=3e-2)
    np.testing.assert_allclose(np.asarray(vec), np.asarray(vec_r), rtol=3e-2, atol=3e-2)
    np.testing.assert_allclose(np.asarray(hidden), np.asarray(hidden_r), rtol=3e-2, atol=3e-2)

    print("KERNEL_OK")
</pallas_src>

<mosaic_0001>
module attributes {stable_mosaic.version = 11 : i64} {
  func.func @gcn_encoder_kernel(%arg0: i32, %arg1: memref<16x32xf32, #tpu.memory_space<vmem>>, %arg2: memref<16x64xbf16, #tpu.memory_space<any>>, %arg3: memref<1x1x32xf32, #tpu.memory_space<vmem>>, %arg4: memref<1x1x32xf32, #tpu.memory_space<vmem>>, %arg5: memref<1x32x128xf32, #tpu.memory_space<vmem>>, %arg6: memref<1x32x64xf32, #tpu.memory_space<vmem>>, %arg7: memref<1x1x64xf32, #tpu.memory_space<vmem>>, %arg8: memref<1x64x32xf32, #tpu.memory_space<vmem>>, %arg9: memref<1x1x32xf32, #tpu.memory_space<vmem>>, %arg10: memref<16x32xf32, #tpu.memory_space<vmem>>, %arg11: memref<16x64xbf16, #tpu.memory_space<vmem>>, %arg12: memref<64x32xbf16, #tpu.memory_space<vmem>>, %arg13: memref<1x!tpu.dma_semaphore, #tpu.memory_space<semaphore_mem>>) attributes {dimension_semantics = [#tpu.dimension_semantics<arbitrary>], iteration_bounds = array<i64: 2>, scalar_prefetch = 0 : i64, scratch_operands = 3 : i64, tpu.core_type = #tpu.core_type<tc>, window_params = [{pipeline_mode = #tpu.pipeline_mode<synchronous>, transform_indices = @transform_0, window_bounds = array<i64: 16, 32>}, {}, {transform_indices = @transform_2, window_bounds = array<i64: 1, 1, 32>}, {transform_indices = @transform_3, window_bounds = array<i64: 1, 1, 32>}, {transform_indices = @transform_4, window_bounds = array<i64: 1, 32, 128>}, {transform_indices = @transform_5, window_bounds = array<i64: 1, 32, 64>}, {transform_indices = @transform_6, window_bounds = array<i64: 1, 1, 64>}, {transform_indices = @transform_7, window_bounds = array<i64: 1, 64, 32>}, {transform_indices = @transform_8, window_bounds = array<i64: 1, 1, 32>}, {pipeline_mode = #tpu.pipeline_mode<synchronous>, transform_indices = @transform_9, window_bounds = array<i64: 16, 32>}]} {
    %c0_i32 = arith.constant 0 : i32
    %0 = arith.cmpi eq, %arg0, %c0_i32 : i32
    %1 = arith.extui %0 : i1 to i32
    %c0_i32_0 = arith.constant 0 : i32
    %2 = arith.cmpi ne, %1, %c0_i32_0 : i32
    scf.if %2 {
      %c0_44 = arith.constant 0 : index
      %c0_45 = arith.constant 0 : index
      %70 = vector.load %arg1[%c0_44, %c0_45] : memref<16x32xf32, #tpu.memory_space<vmem>>, vector<16x32xf32>
      %c0_46 = arith.constant 0 : index
      %c0_47 = arith.constant 0 : index
      %71 = vector.load %arg10[%c0_46, %c0_47] : memref<16x32xf32, #tpu.memory_space<vmem>>, vector<16x32xf32>
      tpu.vector_store %arg10[%c0_46, %c0_47], %70 {strides = array<i32>} : memref<16x32xf32, #tpu.memory_space<vmem>>, vector<16x32xf32>,
      %c0_i32_48 = arith.constant 0 : i32
      %72 = tpu.memref_slice %arg13[%c0_i32_48] : memref<1x!tpu.dma_semaphore, #tpu.memory_space<semaphore_mem>> -> memref<1x!tpu.dma_semaphore, #tpu.memory_space<semaphore_mem>>
      %73 = tpu.memref_squeeze %72 : memref<1x!tpu.dma_semaphore, #tpu.memory_space<semaphore_mem>> -> memref<!tpu.dma_semaphore, #tpu.memory_space<semaphore_mem>>
      tpu.enqueue_dma source(%arg2 : memref<16x64xbf16, #tpu.memory_space<any>>) target(%arg11 : memref<16x64xbf16, #tpu.memory_space<vmem>>) target_semaphore(%73 : memref<!tpu.dma_semaphore, #tpu.memory_space<semaphore_mem>>)
      %c0_i32_49 = arith.constant 0 : i32
      %74 = tpu.memref_slice %arg13[%c0_i32_49] : memref<1x!tpu.dma_semaphore, #tpu.memory_space<semaphore_mem>> -> memref<1x!tpu.dma_semaphore, #tpu.memory_space<semaphore_mem>>
      %75 = tpu.memref_squeeze %74 : memref<1x!tpu.dma_semaphore, #tpu.memory_space<semaphore_mem>> -> memref<!tpu.dma_semaphore, #tpu.memory_space<semaphore_mem>>
      tpu.wait_dma2 semaphore(%75 : memref<!tpu.dma_semaphore, #tpu.memory_space<semaphore_mem>>) src(%arg2 : memref<16x64xbf16, #tpu.memory_space<any>>) dst(%arg11 : memref<16x64xbf16, #tpu.memory_space<vmem>>)
    } else {
    }
    %c0 = arith.constant 0 : index
    %c0_1 = arith.constant 0 : index
    %3 = vector.load %arg10[%c0, %c0_1] : memref<16x32xf32, #tpu.memory_space<vmem>>, vector<16x32xf32>
    %cst = arith.constant dense<0.000000e+00> : vector<16xf32>
    %4 = vector.multi_reduction <add>, %3, %cst [1] : vector<16x32xf32> to vector<16xf32>
    %5 = vector.shape_cast %4 : vector<16xf32> to vector<16x1xf32>
    %cst_2 = arith.constant 3.200000e+01 : f32
    %6 = vector.broadcast %cst_2 : f32 to vector<16x1xf32>
    %7 = arith.divf %5, %6 : vector<16x1xf32>
    %8 = vector.broadcast %7 : vector<16x1xf32> to vector<16x32xf32>
    %9 = arith.subf %3, %8 : vector<16x32xf32>
    %10 = arith.mulf %9, %9 : vector<16x32xf32>
    %cst_3 = arith.constant dense<0.000000e+00> : vector<16xf32>
    %11 = vector.multi_reduction <add>, %10, %cst_3 [1] : vector<16x32xf32> to vector<16xf32>
    %12 = vector.shape_cast %11 : vector<16xf32> to vector<16x1xf32>
    %cst_4 = arith.constant 3.200000e+01 : f32
    %13 = vector.broadcast %cst_4 : f32 to vector<16x1xf32>
    %14 = arith.divf %12, %13 : vector<16x1xf32>
    %15 = vector.broadcast %7 : vector<16x1xf32> to vector<16x32xf32>
    %16 = arith.subf %3, %15 : vector<16x32xf32>
    %cst_5 = arith.constant 9.99999997E-7 : f32
    %17 = vector.broadcast %cst_5 : f32 to vector<16x1xf32>
    %18 = arith.addf %14, %17 : vector<16x1xf32>
    %19 = math.rsqrt %18 : vector<16x1xf32>
    %20 = vector.broadcast %19 : vector<16x1xf32> to vector<16x32xf32>
    %21 = arith.mulf %16, %20 : vector<16x32xf32>
    %c0_6 = arith.constant 0 : index
    %c0_7 = arith.constant 0 : index
    %c0_8 = arith.constant 0 : index
    %22 = vector.load %arg3[%c0_6, %c0_7, %c0_8] : memref<1x1x32xf32, #tpu.memory_space<vmem>>, vector<1x1x32xf32>
    %23 = vector.shape_cast %22 : vector<1x1x32xf32> to vector<1x32xf32>
    %24 = vector.broadcast %23 : vector<1x32xf32> to vector<16x32xf32>
    %25 = arith.mulf %21, %24 : vector<16x32xf32>
    %c0_9 = arith.constant 0 : index
    %c0_10 = arith.constant 0 : index
    %c0_11 = arith.constant 0 : index
    %26 = vector.load %arg4[%c0_9, %c0_10, %c0_11] : memref<1x1x32xf32, #tpu.memory_space<vmem>>, vector<1x1x32xf32>
    %27 = vector.shape_cast %26 : vector<1x1x32xf32> to vector<1x32xf32>
    %28 = vector.broadcast %27 : vector<1x32xf32> to vector<16x32xf32>
    %29 = arith.addf %25, %28 : vector<16x32xf32>
    %c0_12 = arith.constant 0 : index
    %c0_13 = arith.constant 0 : index
    %c0_14 = arith.constant 0 : index
    %30 = vector.load %arg5[%c0_12, %c0_13, %c0_14] : memref<1x32x128xf32, #tpu.memory_space<vmem>>, vector<1x32x128xf32>
    %31 = vector.shape_cast %30 : vector<1x32x128xf32> to vector<32x128xf32>
    %cst_15 = arith.constant dense<0.000000e+00> : vector<16x128xf32>
    %32 = tpu.matmul %29, %31, %cst_15 {dimension_numbers = #tpu.dot_dimension_numbers<[1], [0], [0], [1], [0, 0, 1, 1], [], []>} : vector<16x32xf32>, vector<32x128xf32>, vector<16x128xf32> -> vector<16x128xf32>
    %33 = vector.extract_strided_slice %32 {offsets = [0, 0], sizes = [16, 32], strides = [1, 1]} : vector<16x128xf32> to vector<16x32xf32>
    %34 = arith.truncf %33 : vector<16x32xf32> to vector<16x32xbf16>
    %c0_16 = arith.constant 0 : index
    %c0_17 = arith.constant 0 : index
    %35 = vector.load %arg12[%c0_16, %c0_17] : memref<64x32xbf16, #tpu.memory_space<vmem>>, vector<16x32xbf16>
    tpu.vector_store %arg12[%c0_16, %c0_17], %34 {strides = array<i32>} : memref<64x32xbf16, #tpu.memory_space<vmem>>, vector<16x32xbf16>,
    %36 = vector.extract_strided_slice %32 {offsets = [0, 32], sizes = [16, 32], strides = [1, 1]} : vector<16x128xf32> to vector<16x32xf32>
    %37 = arith.truncf %36 : vector<16x32xf32> to vector<16x32xbf16>
    %c16 = arith.constant 16 : index
    %c0_18 = arith.constant 0 : index
    %38 = vector.load %arg12[%c16, %c0_18] : memref<64x32xbf16, #tpu.memory_space<vmem>>, vector<16x32xbf16>
    tpu.vector_store %arg12[%c16, %c0_18], %37 {strides = array<i32>} : memref<64x32xbf16, #tpu.memory_space<vmem>>, vector<16x32xbf16>,
    %39 = vector.extract_strided_slice %32 {offsets = [0, 64], sizes = [16, 32], strides = [1, 1]} : vector<16x128xf32> to vector<16x32xf32>
    %40 = arith.truncf %39 : vector<16x32xf32> to vector<16x32xbf16>
    %c32 = arith.constant 32 : index
    %c0_19 = arith.constant 0 : index
    %41 = vector.load %arg12[%c32, %c0_19] : memref<64x32xbf16, #tpu.memory_space<vmem>>, vector<16x32xbf16>
    tpu.vector_store %arg12[%c32, %c0_19], %40 {strides = array<i32>} : memref<64x32xbf16, #tpu.memory_space<vmem>>, vector<16x32xbf16>,
    %42 = vector.extract_strided_slice %32 {offsets = [0, 96], sizes = [16, 32], strides = [1, 1]} : vector<16x128xf32> to vector<16x32xf32>
    %43 = arith.truncf %42 : vector<16x32xf32> to vector<16x32xbf16>
    %c48 = arith.constant 48 : index
    %c0_20 = arith.constant 0 : index
    %44 = vector.load %arg12[%c48, %c0_20] : memref<64x32xbf16, #tpu.memory_space<vmem>>, vector<16x32xbf16>
    tpu.vector_store %arg12[%c48, %c0_20], %43 {strides = array<i32>} : memref<64x32xbf16, #tpu.memory_space<vmem>>, vector<16x32xbf16>,
    %c0_21 = arith.constant 0 : index
    %c0_22 = arith.constant 0 : index
    %45 = vector.load %arg11[%c0_21, %c0_22] : memref<16x64xbf16, #tpu.memory_space<vmem>>, vector<16x64xbf16>
    %c0_23 = arith.constant 0 : index
    %c0_24 = arith.constant 0 : index
    %46 = vector.load %arg12[%c0_23, %c0_24] : memref<64x32xbf16, #tpu.memory_space<vmem>>, vector<64x32xbf16>
    %cst_25 = arith.constant dense<0.000000e+00> : vector<16x32xf32>
    %47 = tpu.matmul %45, %46, %cst_25 {dimension_numbers = #tpu.dot_dimension_numbers<[1], [0], [0], [1], [0, 0, 1, 1], [], []>} : vector<16x64xbf16>, vector<64x32xbf16>, vector<16x32xf32> -> vector<16x32xf32>
    %48 = arith.addf %29, %47 : vector<16x32xf32>
    %c0_26 = arith.constant 0 : index
    %c0_27 = arith.constant 0 : index
    %c0_28 = arith.constant 0 : index
    %49 = vector.load %arg6[%c0_26, %c0_27, %c0_28] : memref<1x32x64xf32, #tpu.memory_space<vmem>>, vector<1x32x64xf32>
    %50 = vector.shape_cast %49 : vector<1x32x64xf32> to vector<32x64xf32>
    %cst_29 = arith.constant dense<0.000000e+00> : vector<16x64xf32>
    %51 = tpu.matmul %48, %50, %cst_29 {dimension_numbers = #tpu.dot_dimension_numbers<[1], [0], [0], [1], [0, 0, 1, 1], [], []>} : vector<16x32xf32>, vector<32x64xf32>, vector<16x64xf32> -> vector<16x64xf32>
    %c0_30 = arith.constant 0 : index
    %c0_31 = arith.constant 0 : index
    %c0_32 = arith.constant 0 : index
    %52 = vector.load %arg7[%c0_30, %c0_31, %c0_32] : memref<1x1x64xf32, #tpu.memory_space<vmem>>, vector<1x1x64xf32>
    %53 = vector.shape_cast %52 : vector<1x1x64xf32> to vector<1x64xf32>
    %54 = vector.broadcast %53 : vector<1x64xf32> to vector<16x64xf32>
    %55 = arith.addf %51, %54 : vector<16x64xf32>
    %cst_33 = arith.constant 0.000000e+00 : f32
    %56 = vector.broadcast %cst_33 : f32 to vector<16x64xf32>
    %57 = arith.cmpf ogt, %55, %56 : vector<16x64xf32>
    %cst_34 = arith.constant 0.00999999977 : f32
    %58 = vector.broadcast %cst_34 : f32 to vector<16x64xf32>
    %59 = arith.mulf %58, %55 : vector<16x64xf32>
    %60 = arith.select %57, %55, %59 : vector<16x64xi1>, vector<16x64xf32>
    %c0_35 = arith.constant 0 : index
    %c0_36 = arith.constant 0 : index
    %c0_37 = arith.constant 0 : index
    %61 = vector.load %arg8[%c0_35, %c0_36, %c0_37] : memref<1x64x32xf32, #tpu.memory_space<vmem>>, vector<1x64x32xf32>
    %62 = vector.shape_cast %61 : vector<1x64x32xf32> to vector<64x32xf32>
    %cst_38 = arith.constant dense<0.000000e+00> : vector<16x32xf32>
    %63 = tpu.matmul %60, %62, %cst_38 {dimension_numbers = #tpu.dot_dimension_numbers<[1], [0], [0], [1], [0, 0, 1, 1], [], []>} : vector<16x64xf32>, vector<64x32xf32>, vector<16x32xf32> -> vector<16x32xf32>
    %c0_39 = arith.constant 0 : index
    %c0_40 = arith.constant 0 : index
    %c0_41 = arith.constant 0 : index
    %64 = vector.load %arg9[%c0_39, %c0_40, %c0_41] : memref<1x1x32xf32, #tpu.memory_space<vmem>>, vector<1x1x32xf32>
    %65 = vector.shape_cast %64 : vector<1x1x32xf32> to vector<1x32xf32>
    %66 = vector.broadcast %65 : vector<1x32xf32> to vector<16x32xf32>
    %67 = arith.addf %63, %66 : vector<16x32xf32>
    %68 = arith.addf %48, %67 : vector<16x32xf32>
    %c0_42 = arith.constant 0 : index
    %c0_43 = arith.constant 0 : index
    %69 = vector.load %arg10[%c0_42, %c0_43] : memref<16x32xf32, #tpu.memory_space<vmem>>, vector<16x32xf32>
    tpu.vector_store %arg10[%c0_42, %c0_43], %68 {strides = array<i32>} : memref<16x32xf32, #tpu.memory_space<vmem>>, vector<16x32xf32>,
    return
  }
  func.func @transform_0(%arg0: i32) -> (i32, i32) {
    %c0_i32 = arith.constant 0 : i32
    %c0_i32_0 = arith.constant 0 : i32
    %c0_i32_1 = arith.constant 0 : i32
    return %c0_i32, %c0_i32_0 : i32, i32
  }
  func.func @transform_2(%arg0: i32) -> (i32, i32, i32) {
    %c0_i32 = arith.constant 0 : i32
    %c0_i32_0 = arith.constant 0 : i32
    %c0_i32_1 = arith.constant 0 : i32
    return %arg0, %c0_i32, %c0_i32_0 : i32, i32, i32
  }
  func.func @transform_3(%arg0: i32) -> (i32, i32, i32) {
    %c0_i32 = arith.constant 0 : i32
    %c0_i32_0 = arith.constant 0 : i32
    %c0_i32_1 = arith.constant 0 : i32
    return %arg0, %c0_i32, %c0_i32_0 : i32, i32, i32
  }
  func.func @transform_4(%arg0: i32) -> (i32, i32, i32) {
    %c0_i32 = arith.constant 0 : i32
    %c0_i32_0 = arith.constant 0 : i32
    %c0_i32_1 = arith.constant 0 : i32
    return %arg0, %c0_i32, %c0_i32_0 : i32, i32, i32
  }
  func.func @transform_5(%arg0: i32) -> (i32, i32, i32) {
    %c0_i32 = arith.constant 0 : i32
    %c0_i32_0 = arith.constant 0 : i32
    %c0_i32_1 = arith.constant 0 : i32
    return %arg0, %c0_i32, %c0_i32_0 : i32, i32, i32
  }
  func.func @transform_6(%arg0: i32) -> (i32, i32, i32) {
    %c0_i32 = arith.constant 0 : i32
    %c0_i32_0 = arith.constant 0 : i32
    %c0_i32_1 = arith.constant 0 : i32
    return %arg0, %c0_i32, %c0_i32_0 : i32, i32, i32
  }
  func.func @transform_7(%arg0: i32) -> (i32, i32, i32) {
    %c0_i32 = arith.constant 0 : i32
    %c0_i32_0 = arith.constant 0 : i32
    %c0_i32_1 = arith.constant 0 : i32
    return %arg0, %c0_i32, %c0_i32_0 : i32, i32, i32
  }
  func.func @transform_8(%arg0: i32) -> (i32, i32, i32) {
    %c0_i32 = arith.constant 0 : i32
    %c0_i32_0 = arith.constant 0 : i32
    %c0_i32_1 = arith.constant 0 : i32
    return %arg0, %c0_i32, %c0_i32_0 : i32, i32, i32
  }
  func.func @transform_9(%arg0: i32) -> (i32, i32) {
    %c0_i32 = arith.constant 0 : i32
    %c0_i32_0 = arith.constant 0 : i32
    %c0_i32_1 = arith.constant 0 : i32
    return %c0_i32, %c0_i32_0 : i32, i32
  }
}

</mosaic_0001>

<llo_original>
// kernel: tpu_custom_call.1
$region0: #{tpu_custom_call.1}
  #allocation0 [shape = 'u32[]', space=smem, size = 0x4, offset = 0x4, fixed_abs, tag = 'smem constant byte address 0x4 - core index']
  #allocation1 [shape = 'u32[72,128]{1,0:T(1,128)}', space=vmem, size = 0x9000, scoped, tag = 'internal scratch']
  #allocation2 [shape = 'bf16[16,64]{1,0:T(8,128)(2,1)}', space=vmem, size = 0x1000, scoped, tag = 'scratch operand']
  #allocation3 [shape = 'bf16[64,32]{1,0:T(8,128)(2,1)}', space=vmem, size = 0x4000, scoped, tag = 'scratch operand']
  #allocation4 [shape = 's32[1]{0}', space=sflag, size = 0x4, scoped, tag = 'scratch operand']
  #allocation7 [shape = 's32[]', space=sflag, size = 0x4, offset = 0, fixed_abs, tag = 'sflag constant byte address 0x0 - dummy sync flag']
  %s0 = inlined_call_operand.vmem [shape: f32[16,32], index: 0, kind: input, shape index: {}]
  %s1 = inlined_call_operand.vmem [shape: bf16[16,64], index: 1, kind: input, shape index: {}]
  %s2 = inlined_call_operand.vmem [shape: f32[2,1,32], index: 2, kind: input, shape index: {}]
  %s3 = inlined_call_operand.vmem [shape: f32[2,1,32], index: 3, kind: input, shape index: {}]
  %s4 = inlined_call_operand.vmem [shape: f32[2,32,128], index: 4, kind: input, shape index: {}]
  %s5 = inlined_call_operand.vmem [shape: f32[2,32,64], index: 5, kind: input, shape index: {}]
  %s6 = inlined_call_operand.vmem [shape: f32[2,1,64], index: 6, kind: input, shape index: {}]
  %s7 = inlined_call_operand.vmem [shape: f32[2,64,32], index: 7, kind: input, shape index: {}]
  %s8 = inlined_call_operand.vmem [shape: f32[2,1,32], index: 8, kind: input, shape index: {}]
  %s9 = inlined_call_operand.hbm [shape: f32[16,32], index: 9, kind: output, shape index: {}]
  %s10 = sld [smem:[#allocation0]]
  $region103: #{tpu_custom_call.1} parent=0
    _
  %s12 = ssub.s32 1, %s10
  %s13 = scalar_select 0, %s12, %s10
  $region1: #{tpu_custom_call.1} parent=0
    #allocation5 [shape = 'u8[8192]{0}', space=vmem, size = 0x2000, scoped, tag = 'output window, operand 0, single buffered']
    #allocation6 [shape = 's32[2]{0}', space=sflag, size = 0x8, scoped, tag = 'scoped memory for tpu_custom_call.1']
    %14 = vsyncpa [#allocation6], 0
    loop: start=0, step=1, limit=4
    $region2: #{tpu_custom_call.1} parent=1 // loop_pre_header
      _
    $region3: #{tpu_custom_call.1} parent=1 // loop_header
      %s16 = sphi 0, %s20
      %p17 = scmp.ge.s32.totalorder %s16, 4
      %s24 = sphi 0, %s24
      %s26 = sphi 0, %s24
      %s27 = sphi 0, %s26
      %s41 = sphi 0, %s27
      %s47 = sphi 0, %s49
      %s50 = sphi 0, %s47
      %s51 = sphi 0, %s50
      %s67 = sphi 0, %s51
      %s73 = sphi 0, %s75
      %s76 = sphi 0, %s73
      %s77 = sphi 0, %s76
      %s93 = sphi 0, %s77
      %s99 = sphi 0, %s101
      %s102 = sphi 0, %s99
      %s103 = sphi 0, %s102
      %s119 = sphi 0, %s103
      %s125 = sphi 0, %s127
      %s128 = sphi 0, %s125
      %s129 = sphi 0, %s128
      %s145 = sphi 0, %s129
      %s151 = sphi 0, %s153
      %s154 = sphi 0, %s151
      %s155 = sphi 0, %s154
      %s171 = sphi 0, %s155
      %s177 = sphi 0, %s179
      %s180 = sphi 0, %s177
      %s181 = sphi 0, %s180
      %s197 = sphi 0, %s181
      %s203 = sphi 0, %s205
      %s206 = sphi 0, %s203
      %s207 = sphi 0, %s206
      %s223 = sphi 0, %s207
      %s227 = sphi 0, %s227
      %s229 = sphi 0, %s227
      %s230 = sphi 0, %s229
      %s244 = sphi 0, %s230
    $region4: #{tpu_custom_call.1} parent=1 // loop_header_branch
      %19 = sbr.rel (%p17) target = $region8
    $region5: #{tpu_custom_call.1} parent=1 // loop_body
      %s21 = ssub.s32 %s16, 1
      %s22 = ssub.s32 %s16, 2
      %s23 = sadd.s32 %s16, 1
      %s25 = sadd.s32 %s24, 1
      %p28 = scmp.eq.s32.totalorder %s16, 1
      %p29 = scmp.ne.s32.totalorder %s24, %s26
      %p30 = scmp.eq.s32.totalorder %s16, 0
      %p31 = por %p29, %p30
      %p32 = scmp.ne.s32.totalorder %s24, %s26
      %p33 = scmp.eq.s32.totalorder %s21, 1
      %p34 = por %p32, %p33
      %p35 = scmp.ne.s32.totalorder %s26, %s27
      %p36 = scmp.eq.s32.totalorder %s21, 0
      %p37 = por %p35, %p36
      %p38 = scmp.ne.s32.totalorder %s26, %s27
      %p39 = scmp.eq.s32.totalorder %s22, 1
      %p40 = por %p38, %p39
      %p42 = scmp.ne.s32.totalorder %s27, %s41
      %p43 = scmp.eq.s32.totalorder %s22, 0
      %p44 = por %p42, %p43
      %s45 = ssub.s32 %s16, %s23
      %p46 = scmp.eq.s32.totalorder %s45, 0
      %s48 = sadd.s32 %s47, 1
      %s49 = scalar_select %p46, %s47, %s48
      %p52 = pneg %p46
      %p53 = scmp.eq.s32.totalorder %s16, 1
      %p54 = por %p52, %p53
      %p55 = scmp.ne.s32.totalorder %s47, %s50
      %p56 = scmp.eq.s32.totalorder %s16, 0
      %p57 = por %p55, %p56
      %p58 = scmp.ne.s32.totalorder %s47, %s50
      %p59 = scmp.eq.s32.totalorder %s21, 1
      %p60 = por %p58, %p59
      %p61 = scmp.ne.s32.totalorder %s50, %s51
      %p62 = scmp.eq.s32.totalorder %s21, 0
      %p63 = por %p61, %p62
      %p64 = scmp.ne.s32.totalorder %s50, %s51
      %p65 = scmp.eq.s32.totalorder %s22, 1
      %p66 = por %p64, %p65
      %p68 = scmp.ne.s32.totalorder %s51, %s67
      %p69 = scmp.eq.s32.totalorder %s22, 0
      %p70 = por %p68, %p69
      %s71 = ssub.s32 %s16, %s23
      %p72 = scmp.eq.s32.totalorder %s71, 0
      %s74 = sadd.s32 %s73, 1
      %s75 = scalar_select %p72, %s73, %s74
      %p78 = pneg %p72
      %p79 = scmp.eq.s32.totalorder %s16, 1
      %p80 = por %p78, %p79
      %p81 = scmp.ne.s32.totalorder %s73, %s76
      %p82 = scmp.eq.s32.totalorder %s16, 0
      %p83 = por %p81, %p82
      %p84 = scmp.ne.s32.totalorder %s73, %s76
      %p85 = scmp.eq.s32.totalorder %s21, 1
      %p86 = por %p84, %p85
      %p87 = scmp.ne.s32.totalorder %s76, %s77
      %p88 = scmp.eq.s32.totalorder %s21, 0
      %p89 = por %p87, %p88
      %p90 = scmp.ne.s32.totalorder %s76, %s77
      %p91 = scmp.eq.s32.totalorder %s22, 1
      %p92 = por %p90, %p91
      %p94 = scmp.ne.s32.totalorder %s77, %s93
      %p95 = scmp.eq.s32.totalorder %s22, 0
      %p96 = por %p94, %p95
      %s97 = ssub.s32 %s16, %s23
      %p98 = scmp.eq.s32.totalorder %s97, 0
      %s100 = sadd.s32 %s99, 1
      %s101 = scalar_select %p98, %s99, %s100
      %p104 = pneg %p98
      %p105 = scmp.eq.s32.totalorder %s16, 1
      %p106 = por %p104, %p105
      %p107 = scmp.ne.s32.totalorder %s99, %s102
      %p108 = scmp.eq.s32.totalorder %s16, 0
      %p109 = por %p107, %p108
      %p110 = scmp.ne.s32.totalorder %s99, %s102
      %p111 = scmp.eq.s32.totalorder %s21, 1
      %p112 = por %p110, %p111
      %p113 = scmp.ne.s32.totalorder %s102, %s103
      %p114 = scmp.eq.s32.totalorder %s21, 0
      %p115 = por %p113, %p114
      %p116 = scmp.ne.s32.totalorder %s102, %s103
      %p117 = scmp.eq.s32.totalorder %s22, 1
      %p118 = por %p116, %p117
      %p120 = scmp.ne.s32.totalorder %s103, %s119
      %p121 = scmp.eq.s32.totalorder %s22, 0
      %p122 = por %p120, %p121
      %s123 = ssub.s32 %s16, %s23
      %p124 = scmp.eq.s32.totalorder %s123, 0
      %s126 = sadd.s32 %s125, 1
      %s127 = scalar_select %p124, %s125, %s126
      %p130 = pneg %p124
      %p131 = scmp.eq.s32.totalorder %s16, 1
      %p132 = por %p130, %p131
      %p133 = scmp.ne.s32.totalorder %s125, %s128
      %p134 = scmp.eq.s32.totalorder %s16, 0
      %p135 = por %p133, %p134
      %p136 = scmp.ne.s32.totalorder %s125, %s128
      %p137 = scmp.eq.s32.totalorder %s21, 1
      %p138 = por %p136, %p137
      %p139 = scmp.ne.s32.totalorder %s128, %s129
      %p140 = scmp.eq.s32.totalorder %s21, 0
      %p141 = por %p139, %p140
      %p142 = scmp.ne.s32.totalorder %s128, %s129
      %p143 = scmp.eq.s32.totalorder %s22, 1
      %p144 = por %p142, %p143
      %p146 = scmp.ne.s32.totalorder %s129, %s145
      %p147 = scmp.eq.s32.totalorder %s22, 0
      %p148 = por %p146, %p147
      %s149 = ssub.s32 %s16, %s23
      %p150 = scmp.eq.s32.totalorder %s149, 0
      %s152 = sadd.s32 %s151, 1
      %s153 = scalar_select %p150, %s151, %s152
      %p156 = pneg %p150
      %p157 = scmp.eq.s32.totalorder %s16, 1
      %p158 = por %p156, %p157
      %p159 = scmp.ne.s32.totalorder %s151, %s154
      %p160 = scmp.eq.s32.totalorder %s16, 0
      %p161 = por %p159, %p160
      %p162 = scmp.ne.s32.totalorder %s151, %s154
      %p163 = scmp.eq.s32.totalorder %s21, 1
      %p164 = por %p162, %p163
      %p165 = scmp.ne.s32.totalorder %s154, %s155
      %p166 = scmp.eq.s32.totalorder %s21, 0
      %p167 = por %p165, %p166
      %p168 = scmp.ne.s32.totalorder %s154, %s155
      %p169 = scmp.eq.s32.totalorder %s22, 1
      %p170 = por %p168, %p169
      %p172 = scmp.ne.s32.totalorder %s155, %s171
      %p173 = scmp.eq.s32.totalorder %s22, 0
      %p174 = por %p172, %p173
      %s175 = ssub.s32 %s16, %s23
      %p176 = scmp.eq.s32.totalorder %s175, 0
      %s178 = sadd.s32 %s177, 1
      %s179 = scalar_select %p176, %s177, %s178
      %p182 = pneg %p176
      %p183 = scmp.eq.s32.totalorder %s16, 1
      %p184 = por %p182, %p183
      %p185 = scmp.ne.s32.totalorder %s177, %s180
      %p186 = scmp.eq.s32.totalorder %s16, 0
      %p187 = por %p185, %p186
      %p188 = scmp.ne.s32.totalorder %s177, %s180
      %p189 = scmp.eq.s32.totalorder %s21, 1
      %p190 = por %p188, %p189
      %p191 = scmp.ne.s32.totalorder %s180, %s181
      %p192 = scmp.eq.s32.totalorder %s21, 0
      %p193 = por %p191, %p192
      %p194 = scmp.ne.s32.totalorder %s180, %s181
      %p195 = scmp.eq.s32.totalorder %s22, 1
      %p196 = por %p194, %p195
      %p198 = scmp.ne.s32.totalorder %s181, %s197
      %p199 = scmp.eq.s32.totalorder %s22, 0
      %p200 = por %p198, %p199
      %s201 = ssub.s32 %s16, %s23
      %p202 = scmp.eq.s32.totalorder %s201, 0
      %s204 = sadd.s32 %s203, 1
      %s205 = scalar_select %p202, %s203, %s204
      %p208 = pneg %p202
      %p209 = scmp.eq.s32.totalorder %s16, 1
      %p210 = por %p208, %p209
      %p211 = scmp.ne.s32.totalorder %s203, %s206
      %p212 = scmp.eq.s32.totalorder %s16, 0
      %p213 = por %p211, %p212
      %p214 = scmp.ne.s32.totalorder %s203, %s206
      %p215 = scmp.eq.s32.totalorder %s21, 1
      %p216 = por %p214, %p215
      %p217 = scmp.ne.s32.totalorder %s206, %s207
      %p218 = scmp.eq.s32.totalorder %s21, 0
      %p219 = por %p217, %p218
      %p220 = scmp.ne.s32.totalorder %s206, %s207
      %p221 = scmp.eq.s32.totalorder %s22, 1
      %p222 = por %p220, %p221
      %p224 = scmp.ne.s32.totalorder %s207, %s223
      %p225 = scmp.eq.s32.totalorder %s22, 0
      %p226 = por %p224, %p225
      %s228 = sadd.s32 %s227, 1
      %p231 = scmp.eq.s32.totalorder %s16, 1
      %p232 = scmp.ne.s32.totalorder %s227, %s229
      %p233 = scmp.eq.s32.totalorder %s16, 0
      %p234 = por %p232, %p233
      %p235 = scmp.ne.s32.totalorder %s227, %s229
      %p236 = scmp.eq.s32.totalorder %s21, 1
      %p237 = por %p235, %p236
      %p238 = scmp.ne.s32.totalorder %s229, %s230
      %p239 = scmp.eq.s32.totalorder %s21, 0
      %p240 = por %p238, %p239
      %p241 = scmp.ne.s32.totalorder %s229, %s230
      %p242 = scmp.eq.s32.totalorder %s22, 1
      %p243 = por %p241, %p242
      %p245 = scmp.ne.s32.totalorder %s230, %s244
      %p246 = scmp.eq.s32.totalorder %s22, 0
      %p247 = por %p245, %p246
      %p248 = scmp.le.s32.totalorder 1, %s16
      %p249 = scmp.lt.s32.totalorder %s16, 3
      %p250 = pnand %p248, %p249
      %p251 = pneg %p250
      // Predicated region
      $region9: #{tpu_custom_call.1} parent=5 // pred_check
        _
      $region10: #{tpu_custom_call.1} parent=5 // pred_check_branch
        %253 = sbr.rel (%p250) target = $region12
      $region11: #{tpu_custom_call.1} parent=5 // pred_region
        %s254 = ssub.s32 %s16, 1
        // Predicated region
        $region13: #{tpu_custom_call.1} parent=11 // pred_check
          %p255 = pneg %p37
        $region14: #{tpu_custom_call.1} parent=11 // pred_check_branch
          %257 = sbr.rel (%p255) target = $region16
        $region15: #{tpu_custom_call.1} parent=11 // pred_region
          _
        $region16: #{tpu_custom_call.1} parent=11 // pred_fallthru
          _
      $region12: #{tpu_custom_call.1} parent=5 // pred_fallthru
        _
      %p258 = scmp.lt.s32.totalorder %s16, 2
      // Predicated region
      $region17: #{tpu_custom_call.1} parent=5 // pred_check
        %p259 = pneg %p258
      $region18: #{tpu_custom_call.1} parent=5 // pred_check_branch
        %261 = sbr.rel (%p259) target = $region20
      $region19: #{tpu_custom_call.1} parent=5 // pred_region
        // Predicated region
        $region21: #{tpu_custom_call.1} parent=19 // pred_check
          %p262 = pneg %p57
        $region22: #{tpu_custom_call.1} parent=19 // pred_check_branch
          %264 = sbr.rel (%p262) target = $region24
        $region23: #{tpu_custom_call.1} parent=19 // pred_region
          %p265 = scmp.lt.s32.totalorder %s16, 1
          %s266 = scalar_select %p265, %s16, 1
          %s267 = scalar_lea.vmem %s2, %s266
        $region24: #{tpu_custom_call.1} parent=19 // pred_fallthru
          _
        // Predicated region
        $region25: #{tpu_custom_call.1} parent=19 // pred_check
          %p268 = pneg %p83
        $region26: #{tpu_custom_call.1} parent=19 // pred_check_branch
          %270 = sbr.rel (%p268) target = $region28
        $region27: #{tpu_custom_call.1} parent=19 // pred_region
          %p271 = scmp.lt.s32.totalorder %s16, 1
          %s272 = scalar_select %p271, %s16, 1
          %s273 = scalar_lea.vmem %s3, %s272
        $region28: #{tpu_custom_call.1} parent=19 // pred_fallthru
          _
        // Predicated region
        $region29: #{tpu_custom_call.1} parent=19 // pred_check
          %p274 = pneg %p109
        $region30: #{tpu_custom_call.1} parent=19 // pred_check_branch
          %276 = sbr.rel (%p274) target = $region32
        $region31: #{tpu_custom_call.1} parent=19 // pred_region
          %p277 = scmp.lt.s32.totalorder %s16, 1
          %s278 = scalar_select %p277, %s16, 1
          %s279 = smul.addr %s278, 4
          %s280 = smul.addr %s279, 8
          %s281 = scalar_lea.vmem %s4, %s280
        $region32: #{tpu_custom_call.1} parent=19 // pred_fallthru
          _
        // Predicated region
        $region33: #{tpu_custom_call.1} parent=19 // pred_check
          %p282 = pneg %p135
        $region34: #{tpu_custom_call.1} parent=19 // pred_check_branch
          %284 = sbr.rel (%p282) target = $region36
        $region35: #{tpu_custom_call.1} parent=19 // pred_region
          %p285 = scmp.lt.s32.totalorder %s16, 1
          %s286 = scalar_select %p285, %s16, 1
          %s287 = smul.addr %s286, 4
          %s288 = smul.addr %s287, 8
          %s289 = scalar_lea.vmem %s5, %s288
        $region36: #{tpu_custom_call.1} parent=19 // pred_fallthru
          _
        // Predicated region
        $region37: #{tpu_custom_call.1} parent=19 // pred_check
          %p290 = pneg %p161
        $region38: #{tpu_custom_call.1} parent=19 // pred_check_branch
          %292 = sbr.rel (%p290) target = $region40
        $region39: #{tpu_custom_call.1} parent=19 // pred_region
          %p293 = scmp.lt.s32.totalorder %s16, 1
          %s294 = scalar_select %p293, %s16, 1
          %s295 = scalar_lea.vmem %s6, %s294
        $region40: #{tpu_custom_call.1} parent=19 // pred_fallthru
          _
        // Predicated region
        $region41: #{tpu_custom_call.1} parent=19 // pred_check
          %p296 = pneg %p187
        $region42: #{tpu_custom_call.1} parent=19 // pred_check_branch
          %298 = sbr.rel (%p296) target = $region44
        $region43: #{tpu_custom_call.1} parent=19 // pred_region
          %p299 = scmp.lt.s32.totalorder %s16, 1
          %s300 = scalar_select %p299, %s16, 1
          %s301 = smul.addr %s300, 8
          %s302 = smul.addr %s301, 8
          %s303 = scalar_lea.vmem %s7, %s302
        $region44: #{tpu_custom_call.1} parent=19 // pred_fallthru
          _
        // Predicated region
        $region45: #{tpu_custom_call.1} parent=19 // pred_check
          %p304 = pneg %p213
        $region46: #{tpu_custom_call.1} parent=19 // pred_check_branch
          %306 = sbr.rel (%p304) target = $region48
        $region47: #{tpu_custom_call.1} parent=19 // pred_region
          %p307 = scmp.lt.s32.totalorder %s16, 1
          %s308 = scalar_select %p307, %s16, 1
          %s309 = scalar_lea.vmem %s8, %s308
        $region48: #{tpu_custom_call.1} parent=19 // pred_fallthru
          _
      $region20: #{tpu_custom_call.1} parent=5 // pred_fallthru
        _
      %p310 = scmp.le.s32.totalorder 1, %s16
      %p311 = scmp.lt.s32.totalorder %s16, 3
      %p312 = pnand %p310, %p311
      %p313 = pneg %p312
      // Predicated region
      $region49: #{tpu_custom_call.1} parent=5 // pred_check
        _
      $region50: #{tpu_custom_call.1} parent=5 // pred_check_branch
        %315 = sbr.rel (%p312) target = $region52
      $region51: #{tpu_custom_call.1} parent=5 // pred_region
        %s316 = ssub.s32 %s16, 1
        %p317 = pneg %p37
        %p318 = pneg %p34
        %p319 = scmp.lt.s32.totalorder %s21, 1
        %s320 = scalar_select %p319, %s21, 1
        %s321 = scalar_lea.vmem %s2, %s320
        %p322 = pneg %p63
        %p323 = pneg %p60
        %p324 = scmp.lt.s32.totalorder %s21, 1
        %s325 = scalar_select %p324, %s21, 1
        %s326 = scalar_lea.vmem %s3, %s325
        %p327 = pneg %p89
        %p328 = pneg %p86
        %p329 = scmp.lt.s32.totalorder %s21, 1
        %s330 = scalar_select %p329, %s21, 1
        %s331 = smul.addr %s330, 4
        %s332 = smul.addr %s331, 8
        %s333 = scalar_lea.vmem %s4, %s332
        %p334 = pneg %p115
        %p335 = pneg %p112
        %p336 = scmp.lt.s32.totalorder %s21, 1
        %s337 = scalar_select %p336, %s21, 1
        %s338 = smul.addr %s337, 4
        %s339 = smul.addr %s338, 8
        %s340 = scalar_lea.vmem %s5, %s339
        %p341 = pneg %p141
        %p342 = pneg %p138
        %p343 = scmp.lt.s32.totalorder %s21, 1
        %s344 = scalar_select %p343, %s21, 1
        %s345 = scalar_lea.vmem %s6, %s344
        %p346 = pneg %p167
        %p347 = pneg %p164
        %p348 = scmp.lt.s32.totalorder %s21, 1
        %s349 = scalar_select %p348, %s21, 1
        %s350 = smul.addr %s349, 8
        %s351 = smul.addr %s350, 8
        %s352 = scalar_lea.vmem %s7, %s351
        %p353 = pneg %p193
        %p354 = pneg %p190
        %p355 = scmp.lt.s32.totalorder %s21, 1
        %s356 = scalar_select %p355, %s21, 1
        %s357 = scalar_lea.vmem %s8, %s356
        %p358 = pneg %p219
        %p359 = pneg %p216
        %p360 = pneg %p240
        %p361 = pneg %p237
        %p362 = scmp.lt.s32.totalorder %s21, 1
        %s363 = scalar_select %p362, %s21, 1
        %s364 = scalar_lea.vmem %s2, %s363
        %p365 = scmp.lt.s32.totalorder %s21, 1
        %s366 = scalar_select %p365, %s21, 1
        %s367 = scalar_lea.vmem %s3, %s366
        %p368 = scmp.lt.s32.totalorder %s21, 1
        %s369 = scalar_select %p368, %s21, 1
        %s370 = smul.addr %s369, 4
        %s371 = smul.addr %s370, 8
        %s372 = scalar_lea.vmem %s4, %s371
        %p373 = scmp.lt.s32.totalorder %s21, 1
        %s374 = scalar_select %p373, %s21, 1
        %s375 = smul.addr %s374, 4
        %s376 = smul.addr %s375, 8
        %s377 = scalar_lea.vmem %s5, %s376
        %p378 = scmp.lt.s32.totalorder %s21, 1
        %s379 = scalar_select %p378, %s21, 1
        %s380 = scalar_lea.vmem %s6, %s379
        %p381 = scmp.lt.s32.totalorder %s21, 1
        %s382 = scalar_select %p381, %s21, 1
        %s383 = smul.addr %s382, 8
        %s384 = smul.addr %s383, 8
        %s385 = scalar_lea.vmem %s7, %s384
        %p386 = scmp.lt.s32.totalorder %s21, 1
        %s387 = scalar_select %p386, %s21, 1
        %s388 = scalar_lea.vmem %s8, %s387
        %p390 = scmp.eq.s32.totalorder %s21, 0
        // Predicated region
        $region53: #{tpu_custom_call.1} parent=51 // pred_check
          %p391 = pneg %p390
        $region54: #{tpu_custom_call.1} parent=51 // pred_check_branch
          %393 = sbr.rel (%p391) target = $region56
        $region55: #{tpu_custom_call.1} parent=51 // pred_region
          %v394 = vld [vmem:[%s0] sm:$0xff]
          %v395 = vld [vmem:[%s0 + $0x8] sm:$0xff]
          %vm396 = vcmask 261120
          %397 = vst.msk [vmem:[#allocation5] sm:$0xff] %vm396, %v394
          %398 = vst.msk [vmem:[#allocation5 + $0x8] sm:$0xff] %vm396, %v395
          // Predicated region
          $region57: #{tpu_custom_call.1} parent=55 // pred_check
            _
          $region58: #{tpu_custom_call.1} parent=55 // pred_check_branch
            %400 = sbr.rel (0) target = $region60
          $region59: #{tpu_custom_call.1} parent=55 // pred_region
            // Predicated region
            $region72: #{tpu_custom_call.1} parent=59 // pred_check
              _
            $region73: #{tpu_custom_call.1} parent=59 // pred_check_branch
              %416 = sbr.rel (0) target = $region75
            $region74: #{tpu_custom_call.1} parent=59 // pred_region
              loop: start=0, step=1, limit=1
              $region76: #{tpu_custom_call.1} parent=74 // loop_pre_header
                _
              $region77: #{tpu_custom_call.1} parent=74 // loop_header
                %s418 = sphi 0, %s422
                %p419 = scmp.ge.s32.totalorder %s418, 1
                %s423 = sphi %s1, %s1
                %s424 = sphi [#allocation2], [#allocation2]
              $region78: #{tpu_custom_call.1} parent=74 // loop_header_branch
                %421 = sbr.rel (%p419) target = $region82
              $region79: #{tpu_custom_call.1} parent=74 // loop_body
                %v425 = vld [vmem:[%s423] sm:$0xff]
                %426 = vst [vmem:[%s424] sm:$0xff] %v425
              $region80: #{tpu_custom_call.1} parent=74 // loop_footer
                %s422 = sadd.s32 1, %s418
              $region81: #{tpu_custom_call.1} parent=74 // loop_footer_branch
                %417 = sbr.rel target = $region77
              $region82: #{tpu_custom_call.1} parent=74 // loop_exit
                _
            $region75: #{tpu_custom_call.1} parent=59 // pred_fallthru
              _
            // Predicated region
            $region83: #{tpu_custom_call.1} parent=59 // pred_check
              _
            $region84: #{tpu_custom_call.1} parent=59 // pred_check_branch
              %428 = sbr.rel target = $region86
            $region85: #{tpu_custom_call.1} parent=59 // pred_region
              _
            $region86: #{tpu_custom_call.1} parent=59 // pred_fallthru
              _
          $region60: #{tpu_custom_call.1} parent=55 // pred_fallthru
            _
          // Predicated region
          $region61: #{tpu_custom_call.1} parent=55 // pred_check
            _
          $region62: #{tpu_custom_call.1} parent=55 // pred_check_branch
            %402 = sbr.rel target = $region64
          $region63: #{tpu_custom_call.1} parent=55 // pred_region
            %s404 = ssub.s32 256, 1
            loop: start=0, step=1, limit=1
            $region65: #{tpu_custom_call.1} parent=63 // loop_pre_header
              _
            $region66: #{tpu_custom_call.1} parent=63 // loop_header
              %s406 = sphi 0, %s410
              %p407 = scmp.ge.s32.totalorder %s406, 1
              %s411 = sphi %s1, %s1
              %s412 = sphi [#allocation2], [#allocation2]
            $region67: #{tpu_custom_call.1} parent=63 // loop_header_branch
              %409 = sbr.rel (%p407) target = $region71
            $region68: #{tpu_custom_call.1} parent=63 // loop_body
              %v413 = vld [vmem:[%s411] sm:%s404]
              %414 = vst [vmem:[%s412] sm:%s404] %v413
            $region69: #{tpu_custom_call.1} parent=63 // loop_footer
              %s410 = sadd.s32 1, %s406
            $region70: #{tpu_custom_call.1} parent=63 // loop_footer_branch
              %405 = sbr.rel target = $region66
            $region71: #{tpu_custom_call.1} parent=63 // loop_exit
              _
          $region64: #{tpu_custom_call.1} parent=55 // pred_fallthru
            _
          // Predicated region
          $region87: #{tpu_custom_call.1} parent=55 // pred_check
            _
          $region88: #{tpu_custom_call.1} parent=55 // pred_check_branch
            %431 = sbr.rel (0) target = $region90
          $region89: #{tpu_custom_call.1} parent=55 // pred_region
            %432 = vsyncadd [#allocation4], 128
          $region90: #{tpu_custom_call.1} parent=55 // pred_fallthru
            _
          %s433 = smul.u32 4, 2
          %s434 = smul.u32 %s433, 1
          %s435 = sshll.u32 %s434, 4
          %436 = dma.done [#allocation4], %s435
        $region56: #{tpu_custom_call.1} parent=51 // pred_fallthru
          _
        %v437 = vld [vmem:[#allocation5] sm:$0xff]
        %v438 = vld [vmem:[#allocation5 + $0x8] sm:$0xff]
        %vm439 = vcmask 261120
        %v440 = vsel %vm439, %v437, 0.0
        %441 = vadd.xlane.f32.xlu0 %v440
        %v442 = vpop.xlane.xlu0 %441
        %v443 = vsel %vm439, %v438, 0.0
        %444 = vadd.xlane.f32.xlu0 %v443
        %v445 = vpop.xlane.xlu0 %444
        %v446 = vrcp.pop 32.0
        %v447 = vmul.f32 32.0, %v446
        %v448 = vsub.f32 1.0, %v447
        %v449 = vmul.f32 %v446, %v448
        %v450 = vadd.f32 %v446, %v449
        %vm451 = vweird.f32 %v446
        %v452 = vsel %vm451, %v446, %v450
        %v453 = vmul.f32 %v442, %v452
        %v454 = vmul.f32 %v445, %v452
        %v455 = vsub.f32 %v437, %v453
        %v456 = vsub.f32 %v438, %v454
        %v457 = vmul.f32 %v455, %v455
        %v458 = vmul.f32 %v456, %v456
        %v459 = vsel %vm439, %v457, 0.0
        %460 = vadd.xlane.f32.xlu0 %v459
        %v461 = vpop.xlane.xlu0 %460
        %v462 = vsel %vm439, %v458, 0.0
        %463 = vadd.xlane.f32.xlu0 %v462
        %v464 = vpop.xlane.xlu0 %463
        %v465 = vmul.f32 %v461, %v452
        %v466 = vmul.f32 %v464, %v452
        %v467 = vadd.f32 %v465, 1e-06
        %v468 = vadd.f32 %v466, 1e-06
        %v469 = vrsqrt.pop %v467
        %v470 = vmul.f32 %v469, %v467
        %v471 = vmul.f32 %v470, %v469
        %v472 = vmul.f32 0.5, %v471
        %v473 = vsub.f32 1.5, %v472
        %v474 = vmul.f32 %v469, %v473
        %vm475 = vweird.f32 %v467
        %vm476 = vweird.f32 %v469
        %vm477 = vmor %vm475, %vm476
        %v478 = vsel %vm477, %v469, %v474
        %v479 = vrsqrt.pop %v468
        %v480 = vmul.f32 %v479, %v468
        %v481 = vmul.f32 %v480, %v479
        %v482 = vmul.f32 0.5, %v481
        %v483 = vsub.f32 1.5, %v482
        %v484 = vmul.f32 %v479, %v483
        %vm485 = vweird.f32 %v468
        %vm486 = vweird.f32 %v479
        %vm487 = vmor %vm485, %vm486
        %v488 = vsel %vm487, %v479, %v484
        %v489 = vmul.f32 %v455, %v478
        %v490 = vmul.f32 %v456, %v488
        %v491 = vld [vmem:[%s364] sm:$0x1]
        %v493 = vperm.slane %v491, 0
        %v495 = vmul.f32 %v489, %v493
        %v496 = vmul.f32 %v490, %v493
        %v497 = vld [vmem:[%s367] sm:$0x1]
        %v499 = vperm.slane %v497, 0
        %v501 = vadd.f32 %v495, %v499
        %v502 = vadd.f32 %v496, %v499
        %v503 = vld [vmem:[%s372] sm:$0xff]
        %v504 = vld [vmem:[%s372 + $0x8] sm:$0xff]
        %v505 = vld [vmem:[%s372 + $0x10] sm:$0xff]
        %v506 = vld [vmem:[%s372 + $0x18] sm:$0xff]
        %v508 = vsel %vm439, %v501, 0
        %v511 = vsel %vm439, %v502, 0
        %513 = vmatpush.msra.mxu0 0.0
        %514 = vmatpush.msra.mxu0 0.0
        %515 = vmatpush.msra.mxu0 0.0
        %516 = vmatpush.msra.mxu0 0.0
        %517 = vmatpush.msra.mxu0 0.0
        %518 = vmatpush.msra.mxu0 0.0
        %519 = vmatpush.msra.mxu0 0.0
        %520 = vmatpush.msra.mxu0 0.0
        %521 = vmatpush.msra.mxu0 0.0
        %522 = vmatpush.msra.mxu0 0.0
        %523 = vmatpush.msra.mxu0 0.0
        %524 = vmatpush.msra.mxu0 0.0
        %525 = vmatpush.msra.mxu0 %v506
        %526 = vmatpush.msra.mxu0 %v505
        %527 = vmatpush.msra.mxu0 %v504
        %528 = vmatpush.msra.mxu0 %v503
        %529 = vmatmul.f32.gmra.mxu0 %v508
        %v530 = vpop.f32.mrf.mxu0
        %v531 = vadd.f32 0.0, %v530
        %532 = vmatmul.f32.gmra.mxu0 %v511
        %v533 = vpop.f32.mrf.mxu0
        %v534 = vadd.f32 0.0, %v533
        %535 = vdwg.mxu0
        %v536 = vpack.c.bf16 %v531, %v531
        %v537 = vpack.c.bf16 %v534, %v534
        %vm538 = vcmask 257024
        %539 = vst.msk [vmem:[#allocation3] sm:$0xf] %vm538, %v536
        %540 = vst.msk [vmem:[#allocation3 + $0x4] sm:$0xf] %vm538, %v537
        %543 = vrot.lane.b32.xlu0 %v536, 96
        %v544 = vpop.permute.xlu0 %543
        %545 = vrot.lane.b32.xlu0 %v537, 96
        %v546 = vpop.permute.xlu0 %545
        %549 = vst.msk [vmem:[#allocation3 + $0x8] sm:$0xf] %vm538, %v544
        %550 = vst.msk [vmem:[#allocation3 + $0xc] sm:$0xf] %vm538, %v546
        %551 = vrot.lane.b32.xlu0 %v536, 64
        %v552 = vpop.permute.xlu0 %551
        %553 = vrot.lane.b32.xlu0 %v537, 64
        %v554 = vpop.permute.xlu0 %553
        %557 = vst.msk [vmem:[#allocation3 + $0x10] sm:$0xf] %vm538, %v552
        %558 = vst.msk [vmem:[#allocation3 + $0x14] sm:$0xf] %vm538, %v554
        %559 = vrot.lane.b32.xlu0 %v536, 32
        %v560 = vpop.permute.xlu0 %559
        %561 = vrot.lane.b32.xlu0 %v537, 32
        %v562 = vpop.permute.xlu0 %561
        %565 = vst.msk [vmem:[#allocation3 + $0x18] sm:$0xf] %vm538, %v560
        %566 = vst.msk [vmem:[#allocation3 + $0x1c] sm:$0xf] %vm538, %v562
        %v567 = vld [vmem:[#allocation2] sm:$0xf]
        %v568 = vld [vmem:[#allocation2 + $0x4] sm:$0xf]
        %v569 = vld [vmem:[#allocation3] sm:$0xf]
        %v570 = vld [vmem:[#allocation3 + $0x4] sm:$0xf]
        %v571 = vld [vmem:[#allocation3 + $0x8] sm:$0xf]
        %v572 = vld [vmem:[#allocation3 + $0xc] sm:$0xf]
        %v573 = vld [vmem:[#allocation3 + $0x10] sm:$0xf]
        %v574 = vld [vmem:[#allocation3 + $0x14] sm:$0xf]
        %v575 = vld [vmem:[#allocation3 + $0x18] sm:$0xf]
        %v576 = vld [vmem:[#allocation3 + $0x1c] sm:$0xf]
        %v579 = vunpack.c.l.b16 %v567
        %v580 = vunpack.c.l.b16 %v568
        %v581 = vpack.c.b16 %v580, %v579
        %v590 = vunpack.c.l.b16 %v569
        %v591 = vunpack.c.l.b16 %v570
        %v592 = vunpack.c.l.b16 %v571
        %v593 = vunpack.c.l.b16 %v572
        %v594 = vunpack.c.l.b16 %v573
        %v595 = vunpack.c.l.b16 %v574
        %v596 = vunpack.c.l.b16 %v575
        %v597 = vunpack.c.l.b16 %v576
        %v598 = vpack.c.b16 %v591, %v590
        %v599 = vpack.c.b16 %v593, %v592
        %v600 = vpack.c.b16 %v595, %v594
        %v601 = vpack.c.b16 %v597, %v596
        %vm606 = vcmask 523264
        %v608 = vsel %vm606, %v581, 0
        %610 = vmatpush.bf16.msra.mxu0 0
        %611 = vmatpush.bf16.msra.mxu0 0
        %612 = vmatpush.bf16.msra.mxu0 0
        %613 = vmatpush.bf16.msra.mxu0 0
        %614 = vmatpush.bf16.msra.mxu0 %v601
        %615 = vmatpush.bf16.msra.mxu0 %v600
        %616 = vmatpush.bf16.msra.mxu0 %v599
        %617 = vmatpush.bf16.msra.mxu0 %v598
        %618 = vmatmul.bf16.gmra.mxu0 %v608
        %v619 = vpop.f32.mrf.mxu0
        %v620 = vadd.f32 0.0, %v619
        %v621 = vpop.f32.mrf.mxu0
        %v622 = vadd.f32 0.0, %v621
        %623 = vdwg.mxu0
        %v624 = vadd.f32 %v501, %v620
        %v625 = vadd.f32 %v502, %v622
        %v626 = vld [vmem:[%s377] sm:$0xff]
        %v627 = vld [vmem:[%s377 + $0x8] sm:$0xff]
        %v628 = vld [vmem:[%s377 + $0x10] sm:$0xff]
        %v629 = vld [vmem:[%s377 + $0x18] sm:$0xff]
        %v630 = vld [vmem:[%s380] sm:$0x1]
        %v632 = vperm.slane %v630, 0
        %v635 = vsel %vm439, %v624, 0
        %v638 = vsel %vm439, %v625, 0
        %640 = vmatpush.msra.mxu0 0.0
        %641 = vmatpush.msra.mxu0 0.0
        %642 = vmatpush.msra.mxu0 0.0
        %643 = vmatpush.msra.mxu0 0.0
        %644 = vmatpush.msra.mxu0 0.0
        %645 = vmatpush.msra.mxu0 0.0
        %646 = vmatpush.msra.mxu0 0.0
        %647 = vmatpush.msra.mxu0 0.0
        %648 = vmatpush.msra.mxu0 0.0
        %649 = vmatpush.msra.mxu0 0.0
        %650 = vmatpush.msra.mxu0 0.0
        %651 = vmatpush.msra.mxu0 0.0
        %652 = vmatpush.msra.mxu0 %v629
        %653 = vmatpush.msra.mxu0 %v628
        %654 = vmatpush.msra.mxu0 %v627
        %655 = vmatpush.msra.mxu0 %v626
        %656 = vmatmul.f32.gmra.mxu0 %v635
        %v657 = vpop.f32.mrf.mxu0
        %v658 = vadd.f32 %v632, %v657
        %659 = vmatmul.f32.gmra.mxu0 %v638
        %v660 = vpop.f32.mrf.mxu0
        %v661 = vadd.f32 %v632, %v660
        %662 = vdwg.mxu0
        %vm663 = vcmp.gt.f32.partialorder %v658, 0.0
        %vm664 = vcmp.gt.f32.partialorder %v661, 0.0
        %v665 = vmul.f32 %v658, 0.01
        %v666 = vmul.f32 %v661, 0.01
        %v667 = vsel %vm663, %v658, %v665
        %v668 = vsel %vm664, %v661, %v666
        %v669 = vld [vmem:[%s385] sm:$0xff]
        %v670 = vld [vmem:[%s385 + $0x8] sm:$0xff]
        %v671 = vld [vmem:[%s385 + $0x10] sm:$0xff]
        %v672 = vld [vmem:[%s385 + $0x18] sm:$0xff]
        %v673 = vld [vmem:[%s385 + $0x20] sm:$0xff]
        %v674 = vld [vmem:[%s385 + $0x28] sm:$0xff]
        %v675 = vld [vmem:[%s385 + $0x30] sm:$0xff]
        %v676 = vld [vmem:[%s385 + $0x38] sm:$0xff]
        %v677 = vld [vmem:[%s388] sm:$0x1]
        %v679 = vperm.slane %v677, 0
        %v682 = vsel %vm606, %v667, 0
        %v685 = vsel %vm606, %v668, 0
        %687 = vmatpush.msra.mxu0 0.0
        %688 = vmatpush.msra.mxu0 0.0
        %689 = vmatpush.msra.mxu0 0.0
        %690 = vmatpush.msra.mxu0 0.0
        %691 = vmatpush.msra.mxu0 0.0
        %692 = vmatpush.msra.mxu0 0.0
        %693 = vmatpush.msra.mxu0 0.0
        %694 = vmatpush.msra.mxu0 0.0
        %695 = vmatpush.msra.mxu0 %v676
        %696 = vmatpush.msra.mxu0 %v675
        %697 = vmatpush.msra.mxu0 %v674
        %698 = vmatpush.msra.mxu0 %v673
        %699 = vmatpush.msra.mxu0 %v672
        %700 = vmatpush.msra.mxu0 %v671
        %701 = vmatpush.msra.mxu0 %v670
        %702 = vmatpush.msra.mxu0 %v669
        %703 = vmatmul.f32.gmra.mxu0 %v682
        %v704 = vpop.f32.mrf.mxu0
        %v705 = vadd.f32 %v679, %v704
        %706 = vmatmul.f32.gmra.mxu0 %v685
        %v707 = vpop.f32.mrf.mxu0
        %v708 = vadd.f32 %v679, %v707
        %709 = vdwg.mxu0
        %v710 = vadd.f32 %v624, %v705
        %v711 = vadd.f32 %v625, %v708
        %712 = vst.msk [vmem:[#allocation5] sm:$0xff] %vm439, %v710
        %713 = vst.msk [vmem:[#allocation5 + $0x8] sm:$0xff] %vm439, %v711
        // Predicated region
        $region91: #{tpu_custom_call.1} parent=51 // pred_check
          %p714 = pneg %p237
        $region92: #{tpu_custom_call.1} parent=51 // pred_check_branch
          %716 = sbr.rel (%p714) target = $region94
        $region93: #{tpu_custom_call.1} parent=51 // pred_region
          %718 = vsyncadd [#allocation6], 0
          %s719 = sshll.u32 [#allocation5], 4
          %s720 = int_to_ptr.vmem [resolvable:$true] %s719
          %s721 = sshll.u32 %s9, 4
          %s722 = int_to_ptr.hbm [resolvable:$true] %s721
          %727 = dma.vmem_to_hbm [thread:$0]  %s720, 256, %s722, [#allocation6], 128, 128, 8
        $region94: #{tpu_custom_call.1} parent=51 // pred_fallthru
          _
        // Predicated region
        $region95: #{tpu_custom_call.1} parent=51 // pred_check
          %p728 = pneg %p237
        $region96: #{tpu_custom_call.1} parent=51 // pred_check_branch
          %730 = sbr.rel (%p728) target = $region98
        $region97: #{tpu_custom_call.1} parent=51 // pred_region
          %732 = dma.done [#allocation6], 256
        $region98: #{tpu_custom_call.1} parent=51 // pred_fallthru
          _
      $region52: #{tpu_custom_call.1} parent=5 // pred_fallthru
        _
      %p733 = scmp.le.s32.totalorder 2, %s16
      // Predicated region
      $region99: #{tpu_custom_call.1} parent=5 // pred_check
        %p734 = pneg %p733
      $region100: #{tpu_custom_call.1} parent=5 // pred_check_branch
        %736 = sbr.rel (%p734) target = $region102
      $region101: #{tpu_custom_call.1} parent=5 // pred_region
        %s737 = ssub.s32 %s16, 2
      $region102: #{tpu_custom_call.1} parent=5 // pred_fallthru
        _
    $region6: #{tpu_custom_call.1} parent=1 // loop_footer
      %s20 = sadd.s32 1, %s16
    $region7: #{tpu_custom_call.1} parent=1 // loop_footer_branch
      %15 = sbr.rel target = $region3
    $region8: #{tpu_custom_call.1} parent=1 // loop_exit
      _
    %738 = vsyncpa [#allocation6], 1
    %s739 = scalar_lea.sflag [#allocation6], 1
    %740 = vsyncpa %s739, 1
  %741 = vsyncmov [#allocation4]
  %s742 = vpop.sfrf %741
  %p743 = scmp.eq.s32.totalorder %s742, 0
  %p744 = pneg %p743
  %746 = shalt.err (%p744)

</llo_original>
